<compile_context>
chip_gen: v7x
topology: tpu7x:2x2x1
jax: 0.10.0
libtpu: 0.0.40
codegen_flags: <defaults>
</compile_context>

<pallas_src>
import functools

import jax
import jax.numpy as jnp
from jax.experimental import pallas as pl
from jax.experimental.pallas import tpu as pltpu

_EPS = 1e-5  # PyTorch BatchNorm1d default eps


# --------------------------------------------------------------------- f32-accurate dot
def _split_bf16(a):
    hi = a.astype(jnp.bfloat16)
    lo = (a - hi.astype(jnp.float32)).astype(jnp.bfloat16)
    return hi, lo


def _dot3(a, b, dims):
    """~f32-accurate matmul from 3 native-bf16 MXU passes (== lax.Precision.HIGH).

    Mosaic lowers only DEFAULT (1-pass bf16) / HIGHEST (6-pass) dot precisions, so the
    3-pass split is done by hand: a_hi@b_hi + a_lo@b_hi + a_hi@b_lo, f32 accumulation.
    """
    a_hi, a_lo = _split_bf16(a)
    b_hi, b_lo = _split_bf16(b)
    dg = lambda p, q: jax.lax.dot_general(p, q, dims,
                                          preferred_element_type=jnp.float32)
    return dg(a_hi, b_hi) + dg(a_lo, b_hi) + dg(a_hi, b_lo)


# ----------------------------------------------------------------------------- kernel
def churn_kernel(x_ref,
                 w1_ref, b1_ref,
                 w2_ref, b2_ref,
                 w3_ref, b3_ref,
                 w4_ref, b4_ref,
                 o_ref):
    x = x_ref[...]                                                          # [T, 11]

    # layer_1 (+ bn1 folded on its output side), batch-major so the x stream needs no
    # host relayout.
    h1 = _dot3(x, w1_ref[...], (((1,), (0,)), ((), ()))) + b1_ref[...]      # [T, 64]

    # relu(layer_2); dropout(p=0.2) is identity in eval mode.
    # Contract both last dims (flash-attention pattern) -> output flips to feature-major
    # so the rest of the network and the final store stay lane-dense.
    # TODO(synk): training-mode dropout would need pltpu.prng_seed / prng_random_bits masking.
    h2 = _dot3(w2_ref[...], h1, (((1,), (1,)), ((), ()))) + b2_ref[...]     # [16, T]
    h2 = jnp.maximum(h2, 0.0)

    # bn2 folded into layer_3's input side; relu(layer_3); dropout identity.
    h3 = _dot3(w3_ref[...], h2, (((1,), (0,)), ((), ()))) + b3_ref[...]     # [8, T]
    h3 = jnp.maximum(h3, 0.0)

    # bn3 folded into layer_4's input side. Output dim is 1, so skip the MXU:
    # 8 lane-dense broadcast FMAs + a tiny sublane reduce (VPU/XLU slots have slack).
    o_ref[...] = jnp.sum(w4_ref[...] * h3, axis=0, keepdims=True) + b4_ref[...]   # [1, T]


# ---------------------------------------------------------------------------- wrapper
def _churn_forward_impl(x, folded, *, max_tile=4096, min_steps=4):
    """x: [N, 11] f32 (batch-major, as produced by the data pipeline); returns [N, 1]."""
    (w1t, b1, w2, b2, w3, b3, w4c, b4) = folded
    n = x.shape[0]

    # Lane-aligned batch tile. Keep >= min_steps grid steps when the batch is big enough
    # so the "parallel" batch axis actually shards across both v7x TensorCores.
    n_lane = pl.cdiv(n, 128) * 128
    tile = min(max_tile, n_lane)
    if n_lane // tile < min_steps and tile > 128:
        tile = min(max_tile, max(128, pl.cdiv(pl.cdiv(n_lane, min_steps), 128) * 128))
    n_pad = pl.cdiv(n, tile) * tile
    grid = (n_pad // tile,)

    x_in = x.astype(jnp.float32)
    if n_pad != n:  # batch pad only; no transpose / relayout of x on the host
        x_in = jnp.pad(x_in, ((0, n_pad - n), (0, 0)))

    def resident(arr):  # weights/biases: same block every grid step -> stay in VMEM
        return pl.BlockSpec(arr.shape, lambda i: (0, 0))

    out = pl.pallas_call(
        churn_kernel,
        out_shape=jax.ShapeDtypeStruct((1, n_pad), jnp.float32),
        grid_spec=pltpu.PrefetchScalarGridSpec(
            num_scalar_prefetch=0,
            grid=grid,
            in_specs=[
                pl.BlockSpec((tile, 11), lambda i: (i, 0)),    # x stream, batch-major
                resident(w1t), resident(b1),
                resident(w2), resident(b2),
                resident(w3), resident(b3),
                resident(w4c), resident(b4),
            ],
            out_specs=pl.BlockSpec((1, tile), lambda i: (0, i)),   # lane-dense output
        ),
        compiler_params=pltpu.CompilerParams(
            dimension_semantics=("parallel",),        # megacore-shard the batch axis (v7x)
            vmem_limit_bytes=32 * 1024 * 1024),       # headroom over v5e's 16 MiB default
    )(x_in, w1t, b1, w2, b2, w3, b3, w4c, b4)

    return jnp.transpose(out[:, :n])                  # [N, 1]


churn_forward = jax.jit(_churn_forward_impl, static_argnames=("max_tile", "min_steps"))


# --------------------------------------------------------------- params / fold / reference
def init_raw_params(key):
    """PyTorch-layout params: Linear W [out, in], b [out]; BN gamma/beta/mean/var [feat]."""
    dims = [(11, 64), (64, 16), (16, 8), (8, 1)]
    keys = jax.random.split(key, 6 * len(dims))
    params, ki = [], 0
    for li, (fan_in, fan_out) in enumerate(dims):
        bound = 1.0 / (fan_in ** 0.5)
        w = jax.random.uniform(keys[ki], (fan_out, fan_in),
                               minval=-bound, maxval=bound, dtype=jnp.float32); ki += 1
        b = jax.random.uniform(keys[ki], (fan_out,),
                               minval=-bound, maxval=bound, dtype=jnp.float32); ki += 1
        params += [w, b]
        if li < 3:  # non-trivial BN running stats so the fold is actually exercised
            g  = jax.random.uniform(keys[ki], (fan_out,), minval=0.5, maxval=1.5,
                                    dtype=jnp.float32); ki += 1
            be = 0.1 * jax.random.normal(keys[ki], (fan_out,), dtype=jnp.float32); ki += 1
            m  = 0.1 * jax.random.normal(keys[ki], (fan_out,), dtype=jnp.float32); ki += 1
            v  = jax.random.uniform(keys[ki], (fan_out,), minval=0.5, maxval=1.5,
                                    dtype=jnp.float32); ki += 1
            params += [g, be, m, v]
    return tuple(params)


def fold_params(raw):
    """Fold eval-mode BN (y = s*x + t) into the adjacent Linears; return kernel-layout params."""
    (w1, b1, g1, be1, m1, v1,
     w2, b2, g2, be2, m2, v2,
     w3, b3, g3, be3, m3, v3,
     w4, b4) = raw
    s1 = g1 / jnp.sqrt(v1 + _EPS); t1 = be1 - m1 * s1
    s2 = g2 / jnp.sqrt(v2 + _EPS); t2 = be2 - m2 * s2
    s3 = g3 / jnp.sqrt(v3 + _EPS); t3 = be3 - m3 * s3
    # bn1 right after layer_1 -> fold on layer_1's output side
    w1f = w1 * s1[:, None]; b1f = b1 * s1 + t1
    # bn2 feeds layer_3 (after relu+dropout) -> fold on layer_3's input side
    w3f = w3 * s2[None, :]; b3f = b3 + w3 @ t2
    # bn3 feeds layer_4 -> fold on layer_4's input side
    w4f = w4 * s3[None, :]; b4f = b4 + w4 @ t3
    return (jnp.transpose(w1f), b1f[None, :],   # [11,64], [1,64]  (batch-major layer 1)
            w2,  b2[:, None],                   # [16,64], [16,1]
            w3f, b3f[:, None],                  # [8,16],  [8,1]
            jnp.transpose(w4f),                 # [8,1]  (column for the VPU layer_4 path)
            b4f[:, None])                       # [1,1]


def reference_forward(x, raw):
    """Plain-JAX eval-mode forward matching the PyTorch Sequential order exactly."""
    (w1, b1, g1, be1, m1, v1,
     w2, b2, g2, be2, m2, v2,
     w3, b3, g3, be3, m3, v3,
     w4, b4) = raw
    P = jax.lax.Precision.HIGHEST   # per-dot, instead of the global matmul-precision flag

    def bn(h, g, be, m, v):
        return (h - m) / jnp.sqrt(v + _EPS) * g + be

    h = jnp.dot(x, w1.T, precision=P) + b1
    h = bn(h, g1, be1, m1, v1)
    h = jnp.maximum(jnp.dot(h, w2.T, precision=P) + b2, 0.0)
    h = bn(h, g2, be2, m2, v2)          # dropout: identity in eval
    h = jnp.maximum(jnp.dot(h, w3.T, precision=P) + b3, 0.0)
    h = bn(h, g3, be3, m3, v3)          # dropout: identity in eval
    return jnp.dot(h, w4.T, precision=P) + b4


# ------------------------------------------------------------------------------- main
if __name__ == "__main__":
    key = jax.random.PRNGKey(0)
    k_x, k_p = jax.random.split(key)

    N = 16  # batch size
    x = jax.random.normal(k_x, (N, 11), dtype=jnp.float32)

    raw = init_raw_params(k_p)
    folded = fold_params(raw)

    out = churn_forward(x, folded)
    out = jax.block_until_ready(out)

    ref = reference_forward(x, raw)
    assert out.shape == (N, 1), out.shape
    # Tolerance accounts for 3-pass bf16 (Precision.HIGH-equivalent) kernel dots vs the
    # 6-pass "highest" reference; still ~100x tighter than 1-pass bf16 error.
    assert jnp.allclose(out, ref, atol=2e-4, rtol=2e-4), \
        f"mismatch vs reference, max abs err = {float(jnp.max(jnp.abs(out - ref)))}"

    print("KERNEL_OK")
</pallas_src>

<mosaic_0001>
module attributes {stable_mosaic.version = 11 : i64} {
  func.func @churn_kernel(%arg0: i32, %arg1: memref<128x11xf32, #tpu.memory_space<vmem>>, %arg2: memref<11x64xf32, #tpu.memory_space<vmem>>, %arg3: memref<1x64xf32, #tpu.memory_space<vmem>>, %arg4: memref<16x64xf32, #tpu.memory_space<vmem>>, %arg5: memref<16x1xf32, #tpu.memory_space<vmem>>, %arg6: memref<8x16xf32, #tpu.memory_space<vmem>>, %arg7: memref<8x1xf32, #tpu.memory_space<vmem>>, %arg8: memref<8x1xf32, #tpu.memory_space<vmem>>, %arg9: memref<1x1xf32, #tpu.memory_space<vmem>>, %arg10: memref<1x128xf32, #tpu.memory_space<vmem>>) attributes {dimension_semantics = [#tpu.dimension_semantics<parallel>], iteration_bounds = array<i64: 1>, scalar_prefetch = 0 : i64, scratch_operands = 0 : i64, tpu.core_type = #tpu.core_type<tc>, window_params = [{transform_indices = @transform_0, window_bounds = array<i64: 128, 11>}, {pipeline_mode = #tpu.pipeline_mode<synchronous>, transform_indices = @transform_1, window_bounds = array<i64: 11, 64>}, {pipeline_mode = #tpu.pipeline_mode<synchronous>, transform_indices = @transform_2, window_bounds = array<i64: 1, 64>}, {pipeline_mode = #tpu.pipeline_mode<synchronous>, transform_indices = @transform_3, window_bounds = array<i64: 16, 64>}, {pipeline_mode = #tpu.pipeline_mode<synchronous>, transform_indices = @transform_4, window_bounds = array<i64: 16, 1>}, {pipeline_mode = #tpu.pipeline_mode<synchronous>, transform_indices = @transform_5, window_bounds = array<i64: 8, 16>}, {pipeline_mode = #tpu.pipeline_mode<synchronous>, transform_indices = @transform_6, window_bounds = array<i64: 8, 1>}, {pipeline_mode = #tpu.pipeline_mode<synchronous>, transform_indices = @transform_7, window_bounds = array<i64: 8, 1>}, {pipeline_mode = #tpu.pipeline_mode<synchronous>, transform_indices = @transform_8, window_bounds = array<i64: 1, 1>}, {transform_indices = @transform_9, window_bounds = array<i64: 1, 128>}]} {
    %c0 = arith.constant 0 : index
    %c0_0 = arith.constant 0 : index
    %0 = vector.load %arg1[%c0, %c0_0] : memref<128x11xf32, #tpu.memory_space<vmem>>, vector<128x11xf32>
    %c0_1 = arith.constant 0 : index
    %c0_2 = arith.constant 0 : index
    %1 = vector.load %arg2[%c0_1, %c0_2] : memref<11x64xf32, #tpu.memory_space<vmem>>, vector<11x64xf32>
    %2 = arith.truncf %0 : vector<128x11xf32> to vector<128x11xbf16>
    %3 = arith.extf %2 : vector<128x11xbf16> to vector<128x11xf32>
    %4 = arith.subf %0, %3 : vector<128x11xf32>
    %5 = arith.truncf %4 : vector<128x11xf32> to vector<128x11xbf16>
    %6 = arith.truncf %1 : vector<11x64xf32> to vector<11x64xbf16>
    %7 = arith.extf %6 : vector<11x64xbf16> to vector<11x64xf32>
    %8 = arith.subf %1, %7 : vector<11x64xf32>
    %9 = arith.truncf %8 : vector<11x64xf32> to vector<11x64xbf16>
    %cst = arith.constant dense<0.000000e+00> : vector<128x64xf32>
    %10 = tpu.matmul %2, %6, %cst {dimension_numbers = #tpu.dot_dimension_numbers<[1], [0], [0], [1], [0, 0, 1, 1], [], []>} : vector<128x11xbf16>, vector<11x64xbf16>, vector<128x64xf32> -> vector<128x64xf32>
    %cst_3 = arith.constant dense<0.000000e+00> : vector<128x64xf32>
    %11 = tpu.matmul %5, %6, %cst_3 {dimension_numbers = #tpu.dot_dimension_numbers<[1], [0], [0], [1], [0, 0, 1, 1], [], []>} : vector<128x11xbf16>, vector<11x64xbf16>, vector<128x64xf32> -> vector<128x64xf32>
    %12 = arith.addf %10, %11 : vector<128x64xf32>
    %cst_4 = arith.constant dense<0.000000e+00> : vector<128x64xf32>
    %13 = tpu.matmul %2, %9, %cst_4 {dimension_numbers = #tpu.dot_dimension_numbers<[1], [0], [0], [1], [0, 0, 1, 1], [], []>} : vector<128x11xbf16>, vector<11x64xbf16>, vector<128x64xf32> -> vector<128x64xf32>
    %14 = arith.addf %12, %13 : vector<128x64xf32>
    %c0_5 = arith.constant 0 : index
    %c0_6 = arith.constant 0 : index
    %15 = vector.load %arg3[%c0_5, %c0_6] : memref<1x64xf32, #tpu.memory_space<vmem>>, vector<1x64xf32>
    %16 = vector.broadcast %15 : vector<1x64xf32> to vector<128x64xf32>
    %17 = arith.addf %14, %16 : vector<128x64xf32>
    %c0_7 = arith.constant 0 : index
    %c0_8 = arith.constant 0 : index
    %18 = vector.load %arg4[%c0_7, %c0_8] : memref<16x64xf32, #tpu.memory_space<vmem>>, vector<16x64xf32>
    %19 = arith.truncf %18 : vector<16x64xf32> to vector<16x64xbf16>
    %20 = arith.extf %19 : vector<16x64xbf16> to vector<16x64xf32>
    %21 = arith.subf %18, %20 : vector<16x64xf32>
    %22 = arith.truncf %21 : vector<16x64xf32> to vector<16x64xbf16>
    %23 = arith.truncf %17 : vector<128x64xf32> to vector<128x64xbf16>
    %24 = arith.extf %23 : vector<128x64xbf16> to vector<128x64xf32>
    %25 = arith.subf %17, %24 : vector<128x64xf32>
    %26 = arith.truncf %25 : vector<128x64xf32> to vector<128x64xbf16>
    %cst_9 = arith.constant dense<0.000000e+00> : vector<16x128xf32>
    %27 = tpu.matmul %19, %23, %cst_9 {dimension_numbers = #tpu.dot_dimension_numbers<[1], [1], [0], [0], [0, 0, 1, 0], [], []>} : vector<16x64xbf16>, vector<128x64xbf16>, vector<16x128xf32> -> vector<16x128xf32>
    %cst_10 = arith.constant dense<0.000000e+00> : vector<16x128xf32>
    %28 = tpu.matmul %22, %23, %cst_10 {dimension_numbers = #tpu.dot_dimension_numbers<[1], [1], [0], [0], [0, 0, 1, 0], [], []>} : vector<16x64xbf16>, vector<128x64xbf16>, vector<16x128xf32> -> vector<16x128xf32>
    %29 = arith.addf %27, %28 : vector<16x128xf32>
    %cst_11 = arith.constant dense<0.000000e+00> : vector<16x128xf32>
    %30 = tpu.matmul %19, %26, %cst_11 {dimension_numbers = #tpu.dot_dimension_numbers<[1], [1], [0], [0], [0, 0, 1, 0], [], []>} : vector<16x64xbf16>, vector<128x64xbf16>, vector<16x128xf32> -> vector<16x128xf32>
    %31 = arith.addf %29, %30 : vector<16x128xf32>
    %c0_12 = arith.constant 0 : index
    %c0_13 = arith.constant 0 : index
    %32 = vector.load %arg5[%c0_12, %c0_13] : memref<16x1xf32, #tpu.memory_space<vmem>>, vector<16x1xf32>
    %33 = vector.broadcast %32 : vector<16x1xf32> to vector<16x128xf32>
    %34 = arith.addf %31, %33 : vector<16x128xf32>
    %cst_14 = arith.constant 0.000000e+00 : f32
    %35 = vector.broadcast %cst_14 : f32 to vector<16x128xf32>
    %36 = arith.maximumf %34, %35 : vector<16x128xf32>
    %c0_15 = arith.constant 0 : index
    %c0_16 = arith.constant 0 : index
    %37 = vector.load %arg6[%c0_15, %c0_16] : memref<8x16xf32, #tpu.memory_space<vmem>>, vector<8x16xf32>
    %38 = arith.truncf %37 : vector<8x16xf32> to vector<8x16xbf16>
    %39 = arith.extf %38 : vector<8x16xbf16> to vector<8x16xf32>
    %40 = arith.subf %37, %39 : vector<8x16xf32>
    %41 = arith.truncf %40 : vector<8x16xf32> to vector<8x16xbf16>
    %42 = arith.truncf %36 : vector<16x128xf32> to vector<16x128xbf16>
    %43 = arith.extf %42 : vector<16x128xbf16> to vector<16x128xf32>
    %44 = arith.subf %36, %43 : vector<16x128xf32>
    %45 = arith.truncf %44 : vector<16x128xf32> to vector<16x128xbf16>
    %cst_17 = arith.constant dense<0.000000e+00> : vector<8x128xf32>
    %46 = tpu.matmul %38, %42, %cst_17 {dimension_numbers = #tpu.dot_dimension_numbers<[1], [0], [0], [1], [0, 0, 1, 1], [], []>} : vector<8x16xbf16>, vector<16x128xbf16>, vector<8x128xf32> -> vector<8x128xf32>
    %cst_18 = arith.constant dense<0.000000e+00> : vector<8x128xf32>
    %47 = tpu.matmul %41, %42, %cst_18 {dimension_numbers = #tpu.dot_dimension_numbers<[1], [0], [0], [1], [0, 0, 1, 1], [], []>} : vector<8x16xbf16>, vector<16x128xbf16>, vector<8x128xf32> -> vector<8x128xf32>
    %48 = arith.addf %46, %47 : vector<8x128xf32>
    %cst_19 = arith.constant dense<0.000000e+00> : vector<8x128xf32>
    %49 = tpu.matmul %38, %45, %cst_19 {dimension_numbers = #tpu.dot_dimension_numbers<[1], [0], [0], [1], [0, 0, 1, 1], [], []>} : vector<8x16xbf16>, vector<16x128xbf16>, vector<8x128xf32> -> vector<8x128xf32>
    %50 = arith.addf %48, %49 : vector<8x128xf32>
    %c0_20 = arith.constant 0 : index
    %c0_21 = arith.constant 0 : index
    %51 = vector.load %arg7[%c0_20, %c0_21] : memref<8x1xf32, #tpu.memory_space<vmem>>, vector<8x1xf32>
    %52 = vector.broadcast %51 : vector<8x1xf32> to vector<8x128xf32>
    %53 = arith.addf %50, %52 : vector<8x128xf32>
    %cst_22 = arith.constant 0.000000e+00 : f32
    %54 = vector.broadcast %cst_22 : f32 to vector<8x128xf32>
    %55 = arith.maximumf %53, %54 : vector<8x128xf32>
    %c0_23 = arith.constant 0 : index
    %c0_24 = arith.constant 0 : index
    %56 = vector.load %arg8[%c0_23, %c0_24] : memref<8x1xf32, #tpu.memory_space<vmem>>, vector<8x1xf32>
    %57 = vector.broadcast %56 : vector<8x1xf32> to vector<8x128xf32>
    %58 = arith.mulf %57, %55 : vector<8x128xf32>
    %cst_25 = arith.constant dense<0.000000e+00> : vector<128xf32>
    %59 = vector.multi_reduction <add>, %58, %cst_25 [0] : vector<8x128xf32> to vector<128xf32>
    %60 = vector.shape_cast %59 : vector<128xf32> to vector<1x128xf32>
    %c0_26 = arith.constant 0 : index
    %c0_27 = arith.constant 0 : index
    %61 = vector.load %arg9[%c0_26, %c0_27] : memref<1x1xf32, #tpu.memory_space<vmem>>, vector<1x1xf32>
    %62 = vector.broadcast %61 : vector<1x1xf32> to vector<1x128xf32>
    %63 = arith.addf %60, %62 : vector<1x128xf32>
    %c0_28 = arith.constant 0 : index
    %c0_29 = arith.constant 0 : index
    %64 = vector.load %arg10[%c0_28, %c0_29] : memref<1x128xf32, #tpu.memory_space<vmem>>, vector<1x128xf32>
    tpu.vector_store %arg10[%c0_28, %c0_29], %63 {strides = array<i32>} : memref<1x128xf32, #tpu.memory_space<vmem>>, vector<1x128xf32>,
    return
  }
  func.func @transform_0(%arg0: i32) -> (i32, i32) {
    %c0_i32 = arith.constant 0 : i32
    %c0_i32_0 = arith.constant 0 : i32
    return %arg0, %c0_i32 : i32, i32
  }
  func.func @transform_1(%arg0: i32) -> (i32, i32) {
    %c0_i32 = arith.constant 0 : i32
    %c0_i32_0 = arith.constant 0 : i32
    %c0_i32_1 = arith.constant 0 : i32
    return %c0_i32, %c0_i32_0 : i32, i32
  }
  func.func @transform_2(%arg0: i32) -> (i32, i32) {
    %c0_i32 = arith.constant 0 : i32
    %c0_i32_0 = arith.constant 0 : i32
    %c0_i32_1 = arith.constant 0 : i32
    return %c0_i32, %c0_i32_0 : i32, i32
  }
  func.func @transform_3(%arg0: i32) -> (i32, i32) {
    %c0_i32 = arith.constant 0 : i32
    %c0_i32_0 = arith.constant 0 : i32
    %c0_i32_1 = arith.constant 0 : i32
    return %c0_i32, %c0_i32_0 : i32, i32
  }
  func.func @transform_4(%arg0: i32) -> (i32, i32) {
    %c0_i32 = arith.constant 0 : i32
    %c0_i32_0 = arith.constant 0 : i32
    %c0_i32_1 = arith.constant 0 : i32
    return %c0_i32, %c0_i32_0 : i32, i32
  }
  func.func @transform_5(%arg0: i32) -> (i32, i32) {
    %c0_i32 = arith.constant 0 : i32
    %c0_i32_0 = arith.constant 0 : i32
    %c0_i32_1 = arith.constant 0 : i32
    return %c0_i32, %c0_i32_0 : i32, i32
  }
  func.func @transform_6(%arg0: i32) -> (i32, i32) {
    %c0_i32 = arith.constant 0 : i32
    %c0_i32_0 = arith.constant 0 : i32
    %c0_i32_1 = arith.constant 0 : i32
    return %c0_i32, %c0_i32_0 : i32, i32
  }
  func.func @transform_7(%arg0: i32) -> (i32, i32) {
    %c0_i32 = arith.constant 0 : i32
    %c0_i32_0 = arith.constant 0 : i32
    %c0_i32_1 = arith.constant 0 : i32
    return %c0_i32, %c0_i32_0 : i32, i32
  }
  func.func @transform_8(%arg0: i32) -> (i32, i32) {
    %c0_i32 = arith.constant 0 : i32
    %c0_i32_0 = arith.constant 0 : i32
    %c0_i32_1 = arith.constant 0 : i32
    return %c0_i32, %c0_i32_0 : i32, i32
  }
  func.func @transform_9(%arg0: i32) -> (i32, i32) {
    %c0_i32 = arith.constant 0 : i32
    %c0_i32_0 = arith.constant 0 : i32
    return %c0_i32, %arg0 : i32, i32
  }
}

</mosaic_0001>

<llo_original>
// kernel: _churn_forward_impl.1
$region0: #{_churn_forward_impl.1}
  #allocation0 [shape = 'u32[]', space=smem, size = 0x4, offset = 0x4, fixed_abs, tag = 'smem constant byte address 0x4 - core index']
  #allocation1 [shape = 'u32[144,128]{1,0:T(1,128)}', space=vmem, size = 0x12000, scoped, tag = 'internal scratch']
  #allocation2 [shape = 'f32[1,1]{1,0:T(1,128)S(1)}', space=vmem, size = 0x200, scoped, tag = 'scoped memory for _churn_forward_impl.1']
  %s0 = inlined_call_operand.vmem [shape: f32[128,11], index: 0, kind: input, shape index: {}]
  %s1 = inlined_call_operand.vmem [shape: f32[11,64], index: 1, kind: input, shape index: {}]
  %s2 = inlined_call_operand.vmem [shape: f32[1,64], index: 2, kind: input, shape index: {}]
  %s3 = inlined_call_operand.vmem [shape: f32[16,64], index: 3, kind: input, shape index: {}]
  %s4 = inlined_call_operand.vmem [shape: f32[16,1], index: 4, kind: input, shape index: {}]
  %s5 = inlined_call_operand.vmem [shape: f32[8,16], index: 5, kind: input, shape index: {}]
  %s6 = inlined_call_operand.vmem [shape: f32[8,1], index: 6, kind: input, shape index: {}]
  %s7 = inlined_call_operand.vmem [shape: f32[8,1], index: 7, kind: input, shape index: {}]
  %s8 = inlined_call_operand.<no memory space> [shape: f32[1,1], index: 8, kind: input, shape index: {}]
  %s9 = inlined_call_operand.vmem [shape: f32[1,128], index: 9, kind: output, shape index: {}]
  %s10 = sld [smem:[#allocation0]]
  $region46: #{_churn_forward_impl.1} parent=0
    _
  %s12 = ssub.s32 1, %s10
  %s13 = scalar_select 0, %s12, %s10
  %v14 = vstv %s8
  %15 = vst [vmem:[#allocation2] sm:$0x1] %v14
  // Predicated region
  $region2: #{_churn_forward_impl.1} parent=0 // pred_check
    _
  $region3: #{_churn_forward_impl.1} parent=0 // pred_check_branch
    %17 = sbr.rel (0) target = $region5
  $region4: #{_churn_forward_impl.1} parent=0 // pred_region
    _
  $region5: #{_churn_forward_impl.1} parent=0 // pred_fallthru
    _
  // Predicated region
  $region6: #{_churn_forward_impl.1} parent=0 // pred_check
    _
  $region7: #{_churn_forward_impl.1} parent=0 // pred_check_branch
    %19 = sbr.rel (0) target = $region9
  $region8: #{_churn_forward_impl.1} parent=0 // pred_region
    _
  $region9: #{_churn_forward_impl.1} parent=0 // pred_fallthru
    _
  // Predicated region
  $region10: #{_churn_forward_impl.1} parent=0 // pred_check
    _
  $region11: #{_churn_forward_impl.1} parent=0 // pred_check_branch
    %21 = sbr.rel (0) target = $region13
  $region12: #{_churn_forward_impl.1} parent=0 // pred_region
    _
  $region13: #{_churn_forward_impl.1} parent=0 // pred_fallthru
    _
  // Predicated region
  $region14: #{_churn_forward_impl.1} parent=0 // pred_check
    _
  $region15: #{_churn_forward_impl.1} parent=0 // pred_check_branch
    %23 = sbr.rel (0) target = $region17
  $region16: #{_churn_forward_impl.1} parent=0 // pred_region
    _
  $region17: #{_churn_forward_impl.1} parent=0 // pred_fallthru
    _
  // Predicated region
  $region18: #{_churn_forward_impl.1} parent=0 // pred_check
    _
  $region19: #{_churn_forward_impl.1} parent=0 // pred_check_branch
    %25 = sbr.rel (0) target = $region21
  $region20: #{_churn_forward_impl.1} parent=0 // pred_region
    _
  $region21: #{_churn_forward_impl.1} parent=0 // pred_fallthru
    _
  // Predicated region
  $region22: #{_churn_forward_impl.1} parent=0 // pred_check
    _
  $region23: #{_churn_forward_impl.1} parent=0 // pred_check_branch
    %27 = sbr.rel (0) target = $region25
  $region24: #{_churn_forward_impl.1} parent=0 // pred_region
    _
  $region25: #{_churn_forward_impl.1} parent=0 // pred_fallthru
    _
  // Predicated region
  $region26: #{_churn_forward_impl.1} parent=0 // pred_check
    _
  $region27: #{_churn_forward_impl.1} parent=0 // pred_check_branch
    %29 = sbr.rel (0) target = $region29
  $region28: #{_churn_forward_impl.1} parent=0 // pred_region
    _
  $region29: #{_churn_forward_impl.1} parent=0 // pred_fallthru
    _
  // Predicated region
  $region30: #{_churn_forward_impl.1} parent=0 // pred_check
    _
  $region31: #{_churn_forward_impl.1} parent=0 // pred_check_branch
    %31 = sbr.rel (0) target = $region33
  $region32: #{_churn_forward_impl.1} parent=0 // pred_region
    _
  $region33: #{_churn_forward_impl.1} parent=0 // pred_fallthru
    _
  // Predicated region
  $region34: #{_churn_forward_impl.1} parent=0 // pred_check
    _
  $region35: #{_churn_forward_impl.1} parent=0 // pred_check_branch
    %33 = sbr.rel (0) target = $region37
  $region36: #{_churn_forward_impl.1} parent=0 // pred_region
    _
  $region37: #{_churn_forward_impl.1} parent=0 // pred_fallthru
    _
  %v35 = vld [vmem:[%s0] sm:$0xff]
  %v36 = vld [vmem:[%s0 + $0x8] sm:$0xff]
  %v37 = vld [vmem:[%s0 + $0x10] sm:$0xff]
  %v38 = vld [vmem:[%s0 + $0x18] sm:$0xff]
  %v39 = vld [vmem:[%s0 + $0x20] sm:$0xff]
  %v40 = vld [vmem:[%s0 + $0x28] sm:$0xff]
  %v41 = vld [vmem:[%s0 + $0x30] sm:$0xff]
  %v42 = vld [vmem:[%s0 + $0x38] sm:$0xff]
  %v43 = vld [vmem:[%s0 + $0x40] sm:$0xff]
  %v44 = vld [vmem:[%s0 + $0x48] sm:$0xff]
  %v45 = vld [vmem:[%s0 + $0x50] sm:$0xff]
  %v46 = vld [vmem:[%s0 + $0x58] sm:$0xff]
  %v47 = vld [vmem:[%s0 + $0x60] sm:$0xff]
  %v48 = vld [vmem:[%s0 + $0x68] sm:$0xff]
  %v49 = vld [vmem:[%s0 + $0x70] sm:$0xff]
  %v50 = vld [vmem:[%s0 + $0x78] sm:$0xff]
  %v51 = vld [vmem:[%s1] sm:$0xff]
  %v52 = vld [vmem:[%s1 + $0x8] sm:$0x7]
  %v53 = vpack.c.bf16 %v36, %v35
  %v54 = vpack.c.bf16 %v38, %v37
  %v55 = vpack.c.bf16 %v40, %v39
  %v56 = vpack.c.bf16 %v42, %v41
  %v57 = vpack.c.bf16 %v44, %v43
  %v58 = vpack.c.bf16 %v46, %v45
  %v59 = vpack.c.bf16 %v48, %v47
  %v60 = vpack.c.bf16 %v50, %v49
  %v61 = vunpack.c.l.bf16 %v53
  %v62 = vunpack.c.h.bf16 %v53
  %v63 = vunpack.c.l.bf16 %v54
  %v64 = vunpack.c.h.bf16 %v54
  %v65 = vunpack.c.l.bf16 %v55
  %v66 = vunpack.c.h.bf16 %v55
  %v67 = vunpack.c.l.bf16 %v56
  %v68 = vunpack.c.h.bf16 %v56
  %v69 = vunpack.c.l.bf16 %v57
  %v70 = vunpack.c.h.bf16 %v57
  %v71 = vunpack.c.l.bf16 %v58
  %v72 = vunpack.c.h.bf16 %v58
  %v73 = vunpack.c.l.bf16 %v59
  %v74 = vunpack.c.h.bf16 %v59
  %v75 = vunpack.c.l.bf16 %v60
  %v76 = vunpack.c.h.bf16 %v60
  %v77 = vsub.f32 %v35, %v61
  %v78 = vsub.f32 %v36, %v62
  %v79 = vsub.f32 %v37, %v63
  %v80 = vsub.f32 %v38, %v64
  %v81 = vsub.f32 %v39, %v65
  %v82 = vsub.f32 %v40, %v66
  %v83 = vsub.f32 %v41, %v67
  %v84 = vsub.f32 %v42, %v68
  %v85 = vsub.f32 %v43, %v69
  %v86 = vsub.f32 %v44, %v70
  %v87 = vsub.f32 %v45, %v71
  %v88 = vsub.f32 %v46, %v72
  %v89 = vsub.f32 %v47, %v73
  %v90 = vsub.f32 %v48, %v74
  %v91 = vsub.f32 %v49, %v75
  %v92 = vsub.f32 %v50, %v76
  %v93 = vpack.c.bf16 %v78, %v77
  %v94 = vpack.c.bf16 %v80, %v79
  %v95 = vpack.c.bf16 %v82, %v81
  %v96 = vpack.c.bf16 %v84, %v83
  %v97 = vpack.c.bf16 %v86, %v85
  %v98 = vpack.c.bf16 %v88, %v87
  %v99 = vpack.c.bf16 %v90, %v89
  %v100 = vpack.c.bf16 %v92, %v91
  %v101 = vpack.c.bf16 %v52, %v51
  %v102 = vunpack.c.l.bf16 %v101
  %v103 = vunpack.c.h.bf16 %v101
  %v104 = vsub.f32 %v51, %v102
  %v105 = vsub.f32 %v52, %v103
  %v106 = vpack.c.bf16 %v105, %v104
  %vm107 = vcmask 89088
  %v109 = vsel %vm107, %v93, 0
  %v112 = vsel %vm107, %v94, 0
  %v115 = vsel %vm107, %v95, 0
  %v118 = vsel %vm107, %v96, 0
  %v121 = vsel %vm107, %v97, 0
  %v124 = vsel %vm107, %v98, 0
  %v127 = vsel %vm107, %v99, 0
  %v130 = vsel %vm107, %v100, 0
  %vm132 = vcmask 1044480
  %vm133 = vcmask 1045504
  %v134 = vsel %vm132, 4294967295, 65535
  %v135 = vsel %vm133, %v134, 0
  %v137 = vand.u32 %v101, %v135
  %139 = vmatprep.subr.bf16.mxu0 0
  %140 = vmatpush1.bf16.msra.mxu0 %v137
  %141 = vmatprep.subr.bf16.mxu0 0
  %142 = vmatpush1.bf16.msra.mxu0 0
  %143 = vmatprep.subr.bf16.mxu0 0
  %144 = vmatpush1.bf16.msra.mxu0 0
  %145 = vmatprep.subr.bf16.mxu0 0
  %146 = vmatpush1.bf16.msra.mxu0 0
  %147 = vmatprep.subr.bf16.mxu0 0
  %148 = vmatpush1.bf16.msra.mxu0 0
  %149 = vmatprep.subr.bf16.mxu0 0
  %150 = vmatpush1.bf16.msra.mxu0 0
  %151 = vmatprep.subr.bf16.mxu0 0
  %152 = vmatpush1.bf16.msra.mxu0 0
  %153 = vmatprep.subr.bf16.mxu0 0
  %154 = vmatpush1.bf16.msra.mxu0 0
  %155 = vmatprep.subr.bf16.mxu0 0
  %156 = vmatpush1.bf16.msra.mxu0 0
  %157 = vmatprep.subr.bf16.mxu0 0
  %158 = vmatpush1.bf16.msra.mxu0 0
  %159 = vmatprep.subr.bf16.mxu0 0
  %160 = vmatpush1.bf16.msra.mxu0 0
  %161 = vmatprep.subr.bf16.mxu0 0
  %162 = vmatpush1.bf16.msra.mxu0 0
  %163 = vmatprep.subr.bf16.mxu0 0
  %164 = vmatpush1.bf16.msra.mxu0 0
  %165 = vmatprep.subr.bf16.mxu0 0
  %166 = vmatpush1.bf16.msra.mxu0 0
  %167 = vmatprep.subr.bf16.mxu0 0
  %168 = vmatpush1.bf16.msra.mxu0 0
  %169 = vmatprep.subr.bf16.mxu0 0
  %170 = vmatpush1.bf16.msra.mxu0 0
  %171 = vmatprep.mubr.bf16.mxu0 0
  %172 = vmatmul.mubr.bf16.gmra.mrb[0].mxu0 %v109
  %v173 = vpop.f32.mrb[0].mxu0
  %v174 = vadd.f32 0.0, %v173
  %v175 = vpop.f32.mrb[0].mxu0
  %v176 = vpop.f32.mrb[0].mxu0
  %v177 = vadd.f32 0.0, %v176
  %v178 = vpop.f32.mrb[0].mxu0
  %179 = vmatprep.mubr.bf16.mxu0 0
  %180 = vmatmul.mubr.bf16.gmra.mrb[0].mxu0 %v112
  %v181 = vpop.f32.mrb[0].mxu0
  %v182 = vadd.f32 0.0, %v181
  %v183 = vpop.f32.mrb[0].mxu0
  %v184 = vpop.f32.mrb[0].mxu0
  %v185 = vadd.f32 0.0, %v184
  %v186 = vpop.f32.mrb[0].mxu0
  %187 = vmatprep.mubr.bf16.mxu0 0
  %188 = vmatmul.mubr.bf16.gmra.mrb[0].mxu0 %v115
  %v189 = vpop.f32.mrb[0].mxu0
  %v190 = vadd.f32 0.0, %v189
  %v191 = vpop.f32.mrb[0].mxu0
  %v192 = vpop.f32.mrb[0].mxu0
  %v193 = vadd.f32 0.0, %v192
  %v194 = vpop.f32.mrb[0].mxu0
  %195 = vmatprep.mubr.bf16.mxu0 0
  %196 = vmatmul.mubr.bf16.gmra.mrb[0].mxu0 %v118
  %v197 = vpop.f32.mrb[0].mxu0
  %v198 = vadd.f32 0.0, %v197
  %v199 = vpop.f32.mrb[0].mxu0
  %v200 = vpop.f32.mrb[0].mxu0
  %v201 = vadd.f32 0.0, %v200
  %v202 = vpop.f32.mrb[0].mxu0
  %203 = vmatprep.mubr.bf16.mxu0 0
  %204 = vmatmul.mubr.bf16.gmra.mrb[0].mxu0 %v121
  %v205 = vpop.f32.mrb[0].mxu0
  %v206 = vadd.f32 0.0, %v205
  %v207 = vpop.f32.mrb[0].mxu0
  %v208 = vpop.f32.mrb[0].mxu0
  %v209 = vadd.f32 0.0, %v208
  %v210 = vpop.f32.mrb[0].mxu0
  %211 = vmatprep.mubr.bf16.mxu0 0
  %212 = vmatmul.mubr.bf16.gmra.mrb[0].mxu0 %v124
  %v213 = vpop.f32.mrb[0].mxu0
  %v214 = vadd.f32 0.0, %v213
  %v215 = vpop.f32.mrb[0].mxu0
  %v216 = vpop.f32.mrb[0].mxu0
  %v217 = vadd.f32 0.0, %v216
  %v218 = vpop.f32.mrb[0].mxu0
  %219 = vmatprep.mubr.bf16.mxu0 0
  %220 = vmatmul.mubr.bf16.gmra.mrb[0].mxu0 %v127
  %v221 = vpop.f32.mrb[0].mxu0
  %v222 = vadd.f32 0.0, %v221
  %v223 = vpop.f32.mrb[0].mxu0
  %v224 = vpop.f32.mrb[0].mxu0
  %v225 = vadd.f32 0.0, %v224
  %v226 = vpop.f32.mrb[0].mxu0
  %227 = vmatprep.mubr.bf16.mxu0 0
  %228 = vmatmul.mubr.bf16.gmra.mrb[0].mxu0 %v130
  %v229 = vpop.f32.mrb[0].mxu0
  %v230 = vadd.f32 0.0, %v229
  %v231 = vpop.f32.mrb[0].mxu0
  %v232 = vpop.f32.mrb[0].mxu0
  %v233 = vadd.f32 0.0, %v232
  %v234 = vpop.f32.mrb[0].mxu0
  %235 = vdwg.mxu0
  %v237 = vsel %vm107, %v53, 0
  %v240 = vsel %vm107, %v54, 0
  %v243 = vsel %vm107, %v55, 0
  %v246 = vsel %vm107, %v56, 0
  %v249 = vsel %vm107, %v57, 0
  %v252 = vsel %vm107, %v58, 0
  %v255 = vsel %vm107, %v59, 0
  %v258 = vsel %vm107, %v60, 0
  %260 = vmatprep.subr.bf16.mxu0 0
  %261 = vmatpush1.bf16.msra.mxu0 %v137
  %262 = vmatprep.subr.bf16.mxu0 0
  %263 = vmatpush1.bf16.msra.mxu0 0
  %264 = vmatprep.subr.bf16.mxu0 0
  %265 = vmatpush1.bf16.msra.mxu0 0
  %266 = vmatprep.subr.bf16.mxu0 0
  %267 = vmatpush1.bf16.msra.mxu0 0
  %268 = vmatprep.subr.bf16.mxu0 0
  %269 = vmatpush1.bf16.msra.mxu0 0
  %270 = vmatprep.subr.bf16.mxu0 0
  %271 = vmatpush1.bf16.msra.mxu0 0
  %272 = vmatprep.subr.bf16.mxu0 0
  %273 = vmatpush1.bf16.msra.mxu0 0
  %274 = vmatprep.subr.bf16.mxu0 0
  %275 = vmatpush1.bf16.msra.mxu0 0
  %276 = vmatprep.subr.bf16.mxu0 0
  %277 = vmatpush1.bf16.msra.mxu0 0
  %278 = vmatprep.subr.bf16.mxu0 0
  %279 = vmatpush1.bf16.msra.mxu0 0
  %280 = vmatprep.subr.bf16.mxu0 0
  %281 = vmatpush1.bf16.msra.mxu0 0
  %282 = vmatprep.subr.bf16.mxu0 0
  %283 = vmatpush1.bf16.msra.mxu0 0
  %284 = vmatprep.subr.bf16.mxu0 0
  %285 = vmatpush1.bf16.msra.mxu0 0
  %286 = vmatprep.subr.bf16.mxu0 0
  %287 = vmatpush1.bf16.msra.mxu0 0
  %288 = vmatprep.subr.bf16.mxu0 0
  %289 = vmatpush1.bf16.msra.mxu0 0
  %290 = vmatprep.subr.bf16.mxu0 0
  %291 = vmatpush1.bf16.msra.mxu0 0
  %292 = vmatprep.mubr.bf16.mxu0 0
  %293 = vmatmul.mubr.bf16.gmra.mrb[0].mxu0 %v237
  %v294 = vpop.f32.mrb[0].mxu0
  %v295 = vadd.f32 %v174, %v294
  %v296 = vpop.f32.mrb[0].mxu0
  %v297 = vpop.f32.mrb[0].mxu0
  %v298 = vadd.f32 %v177, %v297
  %v299 = vpop.f32.mrb[0].mxu0
  %300 = vmatprep.mubr.bf16.mxu0 0
  %301 = vmatmul.mubr.bf16.gmra.mrb[0].mxu0 %v240
  %v302 = vpop.f32.mrb[0].mxu0
  %v303 = vadd.f32 %v182, %v302
  %v304 = vpop.f32.mrb[0].mxu0
  %v305 = vpop.f32.mrb[0].mxu0
  %v306 = vadd.f32 %v185, %v305
  %v307 = vpop.f32.mrb[0].mxu0
  %308 = vmatprep.mubr.bf16.mxu0 0
  %309 = vmatmul.mubr.bf16.gmra.mrb[0].mxu0 %v243
  %v310 = vpop.f32.mrb[0].mxu0
  %v311 = vadd.f32 %v190, %v310
  %v312 = vpop.f32.mrb[0].mxu0
  %v313 = vpop.f32.mrb[0].mxu0
  %v314 = vadd.f32 %v193, %v313
  %v315 = vpop.f32.mrb[0].mxu0
  %316 = vmatprep.mubr.bf16.mxu0 0
  %317 = vmatmul.mubr.bf16.gmra.mrb[0].mxu0 %v246
  %v318 = vpop.f32.mrb[0].mxu0
  %v319 = vadd.f32 %v198, %v318
  %v320 = vpop.f32.mrb[0].mxu0
  %v321 = vpop.f32.mrb[0].mxu0
  %v322 = vadd.f32 %v201, %v321
  %v323 = vpop.f32.mrb[0].mxu0
  %324 = vmatprep.mubr.bf16.mxu0 0
  %325 = vmatmul.mubr.bf16.gmra.mrb[0].mxu0 %v249
  %v326 = vpop.f32.mrb[0].mxu0
  %v327 = vadd.f32 %v206, %v326
  %v328 = vpop.f32.mrb[0].mxu0
  %v329 = vpop.f32.mrb[0].mxu0
  %v330 = vadd.f32 %v209, %v329
  %v331 = vpop.f32.mrb[0].mxu0
  %332 = vmatprep.mubr.bf16.mxu0 0
  %333 = vmatmul.mubr.bf16.gmra.mrb[0].mxu0 %v252
  %v334 = vpop.f32.mrb[0].mxu0
  %v335 = vadd.f32 %v214, %v334
  %v336 = vpop.f32.mrb[0].mxu0
  %v337 = vpop.f32.mrb[0].mxu0
  %v338 = vadd.f32 %v217, %v337
  %v339 = vpop.f32.mrb[0].mxu0
  %340 = vmatprep.mubr.bf16.mxu0 0
  %341 = vmatmul.mubr.bf16.gmra.mrb[0].mxu0 %v255
  %v342 = vpop.f32.mrb[0].mxu0
  %v343 = vadd.f32 %v222, %v342
  %v344 = vpop.f32.mrb[0].mxu0
  %v345 = vpop.f32.mrb[0].mxu0
  %v346 = vadd.f32 %v225, %v345
  %v347 = vpop.f32.mrb[0].mxu0
  %348 = vmatprep.mubr.bf16.mxu0 0
  %349 = vmatmul.mubr.bf16.gmra.mrb[0].mxu0 %v258
  %v350 = vpop.f32.mrb[0].mxu0
  %v351 = vadd.f32 %v230, %v350
  %v352 = vpop.f32.mrb[0].mxu0
  %v353 = vpop.f32.mrb[0].mxu0
  %v354 = vadd.f32 %v233, %v353
  %v355 = vpop.f32.mrb[0].mxu0
  %356 = vdwg.mxu0
  %v358 = vand.u32 %v106, %v135
  %360 = vmatprep.subr.bf16.mxu0 0
  %361 = vmatpush1.bf16.msra.mxu0 %v358
  %362 = vmatprep.subr.bf16.mxu0 0
  %363 = vmatpush1.bf16.msra.mxu0 0
  %364 = vmatprep.subr.bf16.mxu0 0
  %365 = vmatpush1.bf16.msra.mxu0 0
  %366 = vmatprep.subr.bf16.mxu0 0
  %367 = vmatpush1.bf16.msra.mxu0 0
  %368 = vmatprep.subr.bf16.mxu0 0
  %369 = vmatpush1.bf16.msra.mxu0 0
  %370 = vmatprep.subr.bf16.mxu0 0
  %371 = vmatpush1.bf16.msra.mxu0 0
  %372 = vmatprep.subr.bf16.mxu0 0
  %373 = vmatpush1.bf16.msra.mxu0 0
  %374 = vmatprep.subr.bf16.mxu0 0
  %375 = vmatpush1.bf16.msra.mxu0 0
  %376 = vmatprep.subr.bf16.mxu0 0
  %377 = vmatpush1.bf16.msra.mxu0 0
  %378 = vmatprep.subr.bf16.mxu0 0
  %379 = vmatpush1.bf16.msra.mxu0 0
  %380 = vmatprep.subr.bf16.mxu0 0
  %381 = vmatpush1.bf16.msra.mxu0 0
  %382 = vmatprep.subr.bf16.mxu0 0
  %383 = vmatpush1.bf16.msra.mxu0 0
  %384 = vmatprep.subr.bf16.mxu0 0
  %385 = vmatpush1.bf16.msra.mxu0 0
  %386 = vmatprep.subr.bf16.mxu0 0
  %387 = vmatpush1.bf16.msra.mxu0 0
  %388 = vmatprep.subr.bf16.mxu0 0
  %389 = vmatpush1.bf16.msra.mxu0 0
  %390 = vmatprep.subr.bf16.mxu0 0
  %391 = vmatpush1.bf16.msra.mxu0 0
  %392 = vmatprep.mubr.bf16.mxu0 0
  %393 = vmatmul.mubr.bf16.gmra.mrb[0].mxu0 %v237
  %v394 = vpop.f32.mrb[0].mxu0
  %v395 = vadd.f32 0.0, %v394
  %v396 = vpop.f32.mrb[0].mxu0
  %v397 = vpop.f32.mrb[0].mxu0
  %v398 = vadd.f32 0.0, %v397
  %v399 = vpop.f32.mrb[0].mxu0
  %400 = vmatprep.mubr.bf16.mxu0 0
  %401 = vmatmul.mubr.bf16.gmra.mrb[0].mxu0 %v240
  %v402 = vpop.f32.mrb[0].mxu0
  %v403 = vadd.f32 0.0, %v402
  %v404 = vpop.f32.mrb[0].mxu0
  %v405 = vpop.f32.mrb[0].mxu0
  %v406 = vadd.f32 0.0, %v405
  %v407 = vpop.f32.mrb[0].mxu0
  %408 = vmatprep.mubr.bf16.mxu0 0
  %409 = vmatmul.mubr.bf16.gmra.mrb[0].mxu0 %v243
  %v410 = vpop.f32.mrb[0].mxu0
  %v411 = vadd.f32 0.0, %v410
  %v412 = vpop.f32.mrb[0].mxu0
  %v413 = vpop.f32.mrb[0].mxu0
  %v414 = vadd.f32 0.0, %v413
  %v415 = vpop.f32.mrb[0].mxu0
  %416 = vmatprep.mubr.bf16.mxu0 0
  %417 = vmatmul.mubr.bf16.gmra.mrb[0].mxu0 %v246
  %v418 = vpop.f32.mrb[0].mxu0
  %v419 = vadd.f32 0.0, %v418
  %v420 = vpop.f32.mrb[0].mxu0
  %v421 = vpop.f32.mrb[0].mxu0
  %v422 = vadd.f32 0.0, %v421
  %v423 = vpop.f32.mrb[0].mxu0
  %424 = vmatprep.mubr.bf16.mxu0 0
  %425 = vmatmul.mubr.bf16.gmra.mrb[0].mxu0 %v249
  %v426 = vpop.f32.mrb[0].mxu0
  %v427 = vadd.f32 0.0, %v426
  %v428 = vpop.f32.mrb[0].mxu0
  %v429 = vpop.f32.mrb[0].mxu0
  %v430 = vadd.f32 0.0, %v429
  %v431 = vpop.f32.mrb[0].mxu0
  %432 = vmatprep.mubr.bf16.mxu0 0
  %433 = vmatmul.mubr.bf16.gmra.mrb[0].mxu0 %v252
  %v434 = vpop.f32.mrb[0].mxu0
  %v435 = vadd.f32 0.0, %v434
  %v436 = vpop.f32.mrb[0].mxu0
  %v437 = vpop.f32.mrb[0].mxu0
  %v438 = vadd.f32 0.0, %v437
  %v439 = vpop.f32.mrb[0].mxu0
  %440 = vmatprep.mubr.bf16.mxu0 0
  %441 = vmatmul.mubr.bf16.gmra.mrb[0].mxu0 %v255
  %v442 = vpop.f32.mrb[0].mxu0
  %v443 = vadd.f32 0.0, %v442
  %v444 = vpop.f32.mrb[0].mxu0
  %v445 = vpop.f32.mrb[0].mxu0
  %v446 = vadd.f32 0.0, %v445
  %v447 = vpop.f32.mrb[0].mxu0
  %448 = vmatprep.mubr.bf16.mxu0 0
  %449 = vmatmul.mubr.bf16.gmra.mrb[0].mxu0 %v258
  %v450 = vpop.f32.mrb[0].mxu0
  %v451 = vadd.f32 0.0, %v450
  %v452 = vpop.f32.mrb[0].mxu0
  %v453 = vpop.f32.mrb[0].mxu0
  %v454 = vadd.f32 0.0, %v453
  %v455 = vpop.f32.mrb[0].mxu0
  %456 = vdwg.mxu0
  %v457 = vadd.f32 %v295, %v395
  %v458 = vadd.f32 %v298, %v398
  %v459 = vadd.f32 %v303, %v403
  %v460 = vadd.f32 %v306, %v406
  %v461 = vadd.f32 %v311, %v411
  %v462 = vadd.f32 %v314, %v414
  %v463 = vadd.f32 %v319, %v419
  %v464 = vadd.f32 %v322, %v422
  %v465 = vadd.f32 %v327, %v427
  %v466 = vadd.f32 %v330, %v430
  %v467 = vadd.f32 %v335, %v435
  %v468 = vadd.f32 %v338, %v438
  %v469 = vadd.f32 %v343, %v443
  %v470 = vadd.f32 %v346, %v446
  %v471 = vadd.f32 %v351, %v451
  %v472 = vadd.f32 %v354, %v454
  %v473 = vld [vmem:[%s2] sm:$0x1]
  %v475 = vlaneseq
  %v476 = vshrl.u32 %v475, 7
  %v477 = vsub.s32 0, %v476
  %v478 = vrot.slane %v473, %v477
  %v480 = vadd.f32 %v457, %v478
  %v481 = vadd.f32 %v458, %v478
  %v482 = vadd.f32 %v459, %v478
  %v483 = vadd.f32 %v460, %v478
  %v484 = vadd.f32 %v461, %v478
  %v485 = vadd.f32 %v462, %v478
  %v486 = vadd.f32 %v463, %v478
  %v487 = vadd.f32 %v464, %v478
  %v488 = vadd.f32 %v465, %v478
  %v489 = vadd.f32 %v466, %v478
  %v490 = vadd.f32 %v467, %v478
  %v491 = vadd.f32 %v468, %v478
  %v492 = vadd.f32 %v469, %v478
  %v493 = vadd.f32 %v470, %v478
  %v494 = vadd.f32 %v471, %v478
  %v495 = vadd.f32 %v472, %v478
  %v496 = vld [vmem:[%s3] sm:$0xff]
  %v497 = vld [vmem:[%s3 + $0x8] sm:$0xff]
  %v498 = vpack.c.bf16 %v497, %v496
  %v499 = vunpack.c.l.bf16 %v498
  %v500 = vunpack.c.h.bf16 %v498
  %v501 = vsub.f32 %v496, %v499
  %v502 = vsub.f32 %v497, %v500
  %v503 = vpack.c.bf16 %v502, %v501
  %v504 = vpack.c.bf16 %v481, %v480
  %v505 = vpack.c.bf16 %v483, %v482
  %v506 = vpack.c.bf16 %v485, %v484
  %v507 = vpack.c.bf16 %v487, %v486
  %v508 = vpack.c.bf16 %v489, %v488
  %v509 = vpack.c.bf16 %v491, %v490
  %v510 = vpack.c.bf16 %v493, %v492
  %v511 = vpack.c.bf16 %v495, %v494
  %v512 = vunpack.c.l.bf16 %v504
  %v513 = vunpack.c.h.bf16 %v504
  %v514 = vunpack.c.l.bf16 %v505
  %v515 = vunpack.c.h.bf16 %v505
  %v516 = vunpack.c.l.bf16 %v506
  %v517 = vunpack.c.h.bf16 %v506
  %v518 = vunpack.c.l.bf16 %v507
  %v519 = vunpack.c.h.bf16 %v507
  %v520 = vunpack.c.l.bf16 %v508
  %v521 = vunpack.c.h.bf16 %v508
  %v522 = vunpack.c.l.bf16 %v509
  %v523 = vunpack.c.h.bf16 %v509
  %v524 = vunpack.c.l.bf16 %v510
  %v525 = vunpack.c.h.bf16 %v510
  %v526 = vunpack.c.l.bf16 %v511
  %v527 = vunpack.c.h.bf16 %v511
  %v528 = vsub.f32 %v480, %v512
  %v529 = vsub.f32 %v481, %v513
  %v530 = vsub.f32 %v482, %v514
  %v531 = vsub.f32 %v483, %v515
  %v532 = vsub.f32 %v484, %v516
  %v533 = vsub.f32 %v485, %v517
  %v534 = vsub.f32 %v486, %v518
  %v535 = vsub.f32 %v487, %v519
  %v536 = vsub.f32 %v488, %v520
  %v537 = vsub.f32 %v489, %v521
  %v538 = vsub.f32 %v490, %v522
  %v539 = vsub.f32 %v491, %v523
  %v540 = vsub.f32 %v492, %v524
  %v541 = vsub.f32 %v493, %v525
  %v542 = vsub.f32 %v494, %v526
  %v543 = vsub.f32 %v495, %v527
  %v544 = vpack.c.bf16 %v529, %v528
  %v545 = vpack.c.bf16 %v531, %v530
  %v546 = vpack.c.bf16 %v533, %v532
  %v547 = vpack.c.bf16 %v535, %v534
  %v548 = vpack.c.bf16 %v537, %v536
  %v549 = vpack.c.bf16 %v539, %v538
  %v550 = vpack.c.bf16 %v541, %v540
  %v551 = vpack.c.bf16 %v543, %v542
  %vm552 = vcmask 523264
  %v554 = vsel %vm552, %v503, 0
  %v557 = vsel %vm552, %v504, 0
  %v560 = vsel %vm552, %v505, 0
  %v563 = vsel %vm552, %v506, 0
  %v566 = vsel %vm552, %v507, 0
  %v569 = vsel %vm552, %v508, 0
  %v572 = vsel %vm552, %v509, 0
  %v575 = vsel %vm552, %v510, 0
  %v578 = vsel %vm552, %v511, 0
  %580 = vmatprep.subr.bf16.mxu0 0
  %581 = vmatpush1.bf16.xpose.msra.mxu0 %v557
  %582 = vmatprep.subr.bf16.mxu0 0
  %583 = vmatpush1.bf16.xpose.msra.mxu0 %v560
  %584 = vmatprep.subr.bf16.mxu0 0
  %585 = vmatpush1.bf16.xpose.msra.mxu0 %v563
  %586 = vmatprep.subr.bf16.mxu0 0
  %587 = vmatpush1.bf16.xpose.msra.mxu0 %v566
  %588 = vmatprep.subr.bf16.mxu0 0
  %589 = vmatpush1.bf16.xpose.msra.mxu0 %v569
  %590 = vmatprep.subr.bf16.mxu0 0
  %591 = vmatpush1.bf16.xpose.msra.mxu0 %v572
  %592 = vmatprep.subr.bf16.mxu0 0
  %593 = vmatpush1.bf16.xpose.msra.mxu0 %v575
  %594 = vmatprep.subr.bf16.mxu0 0
  %595 = vmatpush1.bf16.xpose.msra.mxu0 %v578
  %596 = vmatprep.subr.bf16.mxu0 0
  %597 = vmatpush1.bf16.xpose.msra.mxu0 0
  %598 = vmatprep.subr.bf16.mxu0 0
  %599 = vmatpush1.bf16.xpose.msra.mxu0 0
  %600 = vmatprep.subr.bf16.mxu0 0
  %601 = vmatpush1.bf16.xpose.msra.mxu0 0
  %602 = vmatprep.subr.bf16.mxu0 0
  %603 = vmatpush1.bf16.xpose.msra.mxu0 0
  %604 = vmatprep.subr.bf16.mxu0 0
  %605 = vmatpush1.bf16.xpose.msra.mxu0 0
  %606 = vmatprep.subr.bf16.mxu0 0
  %607 = vmatpush1.bf16.xpose.msra.mxu0 0
  %608 = vmatprep.subr.bf16.mxu0 0
  %609 = vmatpush1.bf16.xpose.msra.mxu0 0
  %610 = vmatprep.subr.bf16.mxu0 0
  %611 = vmatpush1.bf16.xpose.msra.mxu0 0
  %612 = vmatprep.mubr.bf16.mxu0 0
  %613 = vmatmul.mubr.bf16.gmra.mrb[0].mxu0 %v554
  %v614 = vpop.f32.mrb[0].mxu0
  %v615 = vadd.f32 0.0, %v614
  %v616 = vpop.f32.mrb[0].mxu0
  %v617 = vpop.f32.mrb[0].mxu0
  %v618 = vadd.f32 0.0, %v617
  %v619 = vpop.f32.mrb[0].mxu0
  %620 = vdwg.mxu0
  %v622 = vsel %vm552, %v498, 0
  %624 = vmatprep.subr.bf16.mxu0 0
  %625 = vmatpush1.bf16.xpose.msra.mxu0 %v557
  %626 = vmatprep.subr.bf16.mxu0 0
  %627 = vmatpush1.bf16.xpose.msra.mxu0 %v560
  %628 = vmatprep.subr.bf16.mxu0 0
  %629 = vmatpush1.bf16.xpose.msra.mxu0 %v563
  %630 = vmatprep.subr.bf16.mxu0 0
  %631 = vmatpush1.bf16.xpose.msra.mxu0 %v566
  %632 = vmatprep.subr.bf16.mxu0 0
  %633 = vmatpush1.bf16.xpose.msra.mxu0 %v569
  %634 = vmatprep.subr.bf16.mxu0 0
  %635 = vmatpush1.bf16.xpose.msra.mxu0 %v572
  %636 = vmatprep.subr.bf16.mxu0 0
  %637 = vmatpush1.bf16.xpose.msra.mxu0 %v575
  %638 = vmatprep.subr.bf16.mxu0 0
  %639 = vmatpush1.bf16.xpose.msra.mxu0 %v578
  %640 = vmatprep.subr.bf16.mxu0 0
  %641 = vmatpush1.bf16.xpose.msra.mxu0 0
  %642 = vmatprep.subr.bf16.mxu0 0
  %643 = vmatpush1.bf16.xpose.msra.mxu0 0
  %644 = vmatprep.subr.bf16.mxu0 0
  %645 = vmatpush1.bf16.xpose.msra.mxu0 0
  %646 = vmatprep.subr.bf16.mxu0 0
  %647 = vmatpush1.bf16.xpose.msra.mxu0 0
  %648 = vmatprep.subr.bf16.mxu0 0
  %649 = vmatpush1.bf16.xpose.msra.mxu0 0
  %650 = vmatprep.subr.bf16.mxu0 0
  %651 = vmatpush1.bf16.xpose.msra.mxu0 0
  %652 = vmatprep.subr.bf16.mxu0 0
  %653 = vmatpush1.bf16.xpose.msra.mxu0 0
  %654 = vmatprep.subr.bf16.mxu0 0
  %655 = vmatpush1.bf16.xpose.msra.mxu0 0
  %656 = vmatprep.mubr.bf16.mxu0 0
  %657 = vmatmul.mubr.bf16.gmra.mrb[0].mxu0 %v622
  %v658 = vpop.f32.mrb[0].mxu0
  %v659 = vadd.f32 %v615, %v658
  %v660 = vpop.f32.mrb[0].mxu0
  %v661 = vpop.f32.mrb[0].mxu0
  %v662 = vadd.f32 %v618, %v661
  %v663 = vpop.f32.mrb[0].mxu0
  %664 = vdwg.mxu0
  %v666 = vsel %vm552, %v544, 0
  %v669 = vsel %vm552, %v545, 0
  %v672 = vsel %vm552, %v546, 0
  %v675 = vsel %vm552, %v547, 0
  %v678 = vsel %vm552, %v548, 0
  %v681 = vsel %vm552, %v549, 0
  %v684 = vsel %vm552, %v550, 0
  %v687 = vsel %vm552, %v551, 0
  %689 = vmatprep.subr.bf16.mxu0 0
  %690 = vmatpush1.bf16.xpose.msra.mxu0 %v666
  %691 = vmatprep.subr.bf16.mxu0 0
  %692 = vmatpush1.bf16.xpose.msra.mxu0 %v669
  %693 = vmatprep.subr.bf16.mxu0 0
  %694 = vmatpush1.bf16.xpose.msra.mxu0 %v672
  %695 = vmatprep.subr.bf16.mxu0 0
  %696 = vmatpush1.bf16.xpose.msra.mxu0 %v675
  %697 = vmatprep.subr.bf16.mxu0 0
  %698 = vmatpush1.bf16.xpose.msra.mxu0 %v678
  %699 = vmatprep.subr.bf16.mxu0 0
  %700 = vmatpush1.bf16.xpose.msra.mxu0 %v681
  %701 = vmatprep.subr.bf16.mxu0 0
  %702 = vmatpush1.bf16.xpose.msra.mxu0 %v684
  %703 = vmatprep.subr.bf16.mxu0 0
  %704 = vmatpush1.bf16.xpose.msra.mxu0 %v687
  %705 = vmatprep.subr.bf16.mxu0 0
  %706 = vmatpush1.bf16.xpose.msra.mxu0 0
  %707 = vmatprep.subr.bf16.mxu0 0
  %708 = vmatpush1.bf16.xpose.msra.mxu0 0
  %709 = vmatprep.subr.bf16.mxu0 0
  %710 = vmatpush1.bf16.xpose.msra.mxu0 0
  %711 = vmatprep.subr.bf16.mxu0 0
  %712 = vmatpush1.bf16.xpose.msra.mxu0 0
  %713 = vmatprep.subr.bf16.mxu0 0
  %714 = vmatpush1.bf16.xpose.msra.mxu0 0
  %715 = vmatprep.subr.bf16.mxu0 0
  %716 = vmatpush1.bf16.xpose.msra.mxu0 0
  %717 = vmatprep.subr.bf16.mxu0 0
  %718 = vmatpush1.bf16.xpose.msra.mxu0 0
  %719 = vmatprep.subr.bf16.mxu0 0
  %720 = vmatpush1.bf16.xpose.msra.mxu0 0
  %721 = vmatprep.mubr.bf16.mxu0 0
  %722 = vmatmul.mubr.bf16.gmra.mrb[0].mxu0 %v622
  %v723 = vpop.f32.mrb[0].mxu0
  %v724 = vadd.f32 0.0, %v723
  %v725 = vpop.f32.mrb[0].mxu0
  %v726 = vpop.f32.mrb[0].mxu0
  %v727 = vadd.f32 0.0, %v726
  %v728 = vpop.f32.mrb[0].mxu0
  %729 = vdwg.mxu0
  %v730 = vadd.f32 %v659, %v724
  %v731 = vadd.f32 %v662, %v727
  %v732 = vld [vmem:[%s4] sm:$0xff]
  %v733 = vld [vmem:[%s4 + $0x8] sm:$0xff]
  %735 = vset.pattern.permute.xlu0 0
  %736 = vperm.xlu0 %735, %v732
  %v737 = vpop.permute.xlu0 %736
  %740 = vset.pattern.permute.xlu0 0
  %741 = vperm.xlu0 %740, %v733
  %v742 = vpop.permute.xlu0 %741
  %v744 = vadd.f32 %v730, %v737
  %v745 = vadd.f32 %v731, %v742
  %v746 = vmax.f32 %v744, 0.0
  %v747 = vmax.f32 %v745, 0.0
  %v748 = vld [vmem:[%s5] sm:$0xff]
  %v749 = vpack.c.bf16 %v748, %v748
  %v750 = vunpack.c.l.bf16 %v749
  %v751 = vsub.f32 %v748, %v750
  %v752 = vpack.c.bf16 %v751, %v751
  %v753 = vpack.c.bf16 %v747, %v746
  %v754 = vunpack.c.l.bf16 %v753
  %v755 = vunpack.c.h.bf16 %v753
  %v756 = vsub.f32 %v746, %v754
  %v757 = vsub.f32 %v747, %v755
  %v758 = vpack.c.bf16 %v757, %v756
  %vm759 = vcmask 130048
  %v761 = vsel %vm759, %v752, 0
  %763 = vmatprep.subr.bf16.mxu0 0
  %764 = vmatpush1.bf16.msra.mxu0 %v753
  %765 = vmatprep.subr.bf16.mxu0 0
  %766 = vmatpush1.bf16.msra.mxu0 0
  %767 = vmatprep.subr.bf16.mxu0 0
  %768 = vmatpush1.bf16.msra.mxu0 0
  %769 = vmatprep.subr.bf16.mxu0 0
  %770 = vmatpush1.bf16.msra.mxu0 0
  %771 = vmatprep.subr.bf16.mxu0 0
  %772 = vmatpush1.bf16.msra.mxu0 0
  %773 = vmatprep.subr.bf16.mxu0 0
  %774 = vmatpush1.bf16.msra.mxu0 0
  %775 = vmatprep.subr.bf16.mxu0 0
  %776 = vmatpush1.bf16.msra.mxu0 0
  %777 = vmatprep.subr.bf16.mxu0 0
  %778 = vmatpush1.bf16.msra.mxu0 0
  %779 = vmatprep.subr.bf16.mxu0 0
  %780 = vmatpush1.bf16.msra.mxu0 0
  %781 = vmatprep.subr.bf16.mxu0 0
  %782 = vmatpush1.bf16.msra.mxu0 0
  %783 = vmatprep.subr.bf16.mxu0 0
  %784 = vmatpush1.bf16.msra.mxu0 0
  %785 = vmatprep.subr.bf16.mxu0 0
  %786 = vmatpush1.bf16.msra.mxu0 0
  %787 = vmatprep.subr.bf16.mxu0 0
  %788 = vmatpush1.bf16.msra.mxu0 0
  %789 = vmatprep.subr.bf16.mxu0 0
  %790 = vmatpush1.bf16.msra.mxu0 0
  %791 = vmatprep.subr.bf16.mxu0 0
  %792 = vmatpush1.bf16.msra.mxu0 0
  %793 = vmatprep.subr.bf16.mxu0 0
  %794 = vmatpush1.bf16.msra.mxu0 0
  %795 = vmatprep.mubr.bf16.mxu0 0
  %796 = vmatmul.mubr.bf16.gmra.mrb[0].mxu0 %v761
  %v797 = vpop.f32.mrb[0].mxu0
  %v798 = vadd.f32 0.0, %v797
  %v799 = vpop.f32.mrb[0].mxu0
  %v800 = vpop.f32.mrb[0].mxu0
  %v801 = vpop.f32.mrb[0].mxu0
  %802 = vdwg.mxu0
  %v804 = vsel %vm759, %v749, 0
  %806 = vmatprep.subr.bf16.mxu0 0
  %807 = vmatpush1.bf16.msra.mxu0 %v753
  %808 = vmatprep.subr.bf16.mxu0 0
  %809 = vmatpush1.bf16.msra.mxu0 0
  %810 = vmatprep.subr.bf16.mxu0 0
  %811 = vmatpush1.bf16.msra.mxu0 0
  %812 = vmatprep.subr.bf16.mxu0 0
  %813 = vmatpush1.bf16.msra.mxu0 0
  %814 = vmatprep.subr.bf16.mxu0 0
  %815 = vmatpush1.bf16.msra.mxu0 0
  %816 = vmatprep.subr.bf16.mxu0 0
  %817 = vmatpush1.bf16.msra.mxu0 0
  %818 = vmatprep.subr.bf16.mxu0 0
  %819 = vmatpush1.bf16.msra.mxu0 0
  %820 = vmatprep.subr.bf16.mxu0 0
  %821 = vmatpush1.bf16.msra.mxu0 0
  %822 = vmatprep.subr.bf16.mxu0 0
  %823 = vmatpush1.bf16.msra.mxu0 0
  %824 = vmatprep.subr.bf16.mxu0 0
  %825 = vmatpush1.bf16.msra.mxu0 0
  %826 = vmatprep.subr.bf16.mxu0 0
  %827 = vmatpush1.bf16.msra.mxu0 0
  %828 = vmatprep.subr.bf16.mxu0 0
  %829 = vmatpush1.bf16.msra.mxu0 0
  %830 = vmatprep.subr.bf16.mxu0 0
  %831 = vmatpush1.bf16.msra.mxu0 0
  %832 = vmatprep.subr.bf16.mxu0 0
  %833 = vmatpush1.bf16.msra.mxu0 0
  %834 = vmatprep.subr.bf16.mxu0 0
  %835 = vmatpush1.bf16.msra.mxu0 0
  %836 = vmatprep.subr.bf16.mxu0 0
  %837 = vmatpush1.bf16.msra.mxu0 0
  %838 = vmatprep.mubr.bf16.mxu0 0
  %839 = vmatmul.mubr.bf16.gmra.mrb[0].mxu0 %v804
  %v840 = vpop.f32.mrb[0].mxu0
  %v841 = vadd.f32 %v798, %v840
  %v842 = vpop.f32.mrb[0].mxu0
  %v843 = vpop.f32.mrb[0].mxu0
  %v844 = vpop.f32.mrb[0].mxu0
  %845 = vdwg.mxu0
  %846 = vmatprep.subr.bf16.mxu0 0
  %847 = vmatpush1.bf16.msra.mxu0 %v758
  %848 = vmatprep.subr.bf16.mxu0 0
  %849 = vmatpush1.bf16.msra.mxu0 0
  %850 = vmatprep.subr.bf16.mxu0 0
  %851 = vmatpush1.bf16.msra.mxu0 0
  %852 = vmatprep.subr.bf16.mxu0 0
  %853 = vmatpush1.bf16.msra.mxu0 0
  %854 = vmatprep.subr.bf16.mxu0 0
  %855 = vmatpush1.bf16.msra.mxu0 0
  %856 = vmatprep.subr.bf16.mxu0 0
  %857 = vmatpush1.bf16.msra.mxu0 0
  %858 = vmatprep.subr.bf16.mxu0 0
  %859 = vmatpush1.bf16.msra.mxu0 0
  %860 = vmatprep.subr.bf16.mxu0 0
  %861 = vmatpush1.bf16.msra.mxu0 0
  %862 = vmatprep.subr.bf16.mxu0 0
  %863 = vmatpush1.bf16.msra.mxu0 0
  %864 = vmatprep.subr.bf16.mxu0 0
  %865 = vmatpush1.bf16.msra.mxu0 0
  %866 = vmatprep.subr.bf16.mxu0 0
  %867 = vmatpush1.bf16.msra.mxu0 0
  %868 = vmatprep.subr.bf16.mxu0 0
  %869 = vmatpush1.bf16.msra.mxu0 0
  %870 = vmatprep.subr.bf16.mxu0 0
  %871 = vmatpush1.bf16.msra.mxu0 0
  %872 = vmatprep.subr.bf16.mxu0 0
  %873 = vmatpush1.bf16.msra.mxu0 0
  %874 = vmatprep.subr.bf16.mxu0 0
  %875 = vmatpush1.bf16.msra.mxu0 0
  %876 = vmatprep.subr.bf16.mxu0 0
  %877 = vmatpush1.bf16.msra.mxu0 0
  %878 = vmatprep.mubr.bf16.mxu0 0
  %879 = vmatmul.mubr.bf16.gmra.mrb[0].mxu0 %v804
  %v880 = vpop.f32.mrb[0].mxu0
  %v881 = vadd.f32 0.0, %v880
  %v882 = vpop.f32.mrb[0].mxu0
  %v883 = vpop.f32.mrb[0].mxu0
  %v884 = vpop.f32.mrb[0].mxu0
  %885 = vdwg.mxu0
  %v886 = vadd.f32 %v841, %v881
  %v887 = vld [vmem:[%s6] sm:$0xff]
  %889 = vset.pattern.permute.xlu0 0
  %890 = vperm.xlu0 %889, %v887
  %v891 = vpop.permute.xlu0 %890
  %v893 = vadd.f32 %v886, %v891
  %v894 = vmax.f32 %v893, 0.0
  %v895 = vld [vmem:[%s7] sm:$0xff]
  %897 = vset.pattern.permute.xlu0 0
  %898 = vperm.xlu0 %897, %v895
  %v899 = vpop.permute.xlu0 %898
  %v901 = vmul.f32 %v899, %v894
  %v902 = vrot.slane %v901, 4
  %v903 = vadd.f32 %v901, %v902
  %v904 = vrot.slane %v903, 2
  %v905 = vadd.f32 %v903, %v904
  %v906 = vrot.slane %v905, 1
  %v907 = vadd.f32 %v905, %v906
  %v908 = vld [vmem:[#allocation2] sm:$0x1]
  %910 = vset.pattern.permute.xlu0 0
  %911 = vperm.xlu0 %910, %v908
  %v912 = vpop.permute.xlu0 %911
  %v914 = vlaneseq
  %v915 = vshrl.u32 %v914, 7
  %v916 = vsub.s32 0, %v915
  %v917 = vrot.slane %v912, %v916
  %v918 = vadd.f32 %v907, %v917
  %919 = vst [vmem:[%s9] sm:$0x1] %v918
  // Predicated region
  $region38: #{_churn_forward_impl.1} parent=0 // pred_check
    _
  $region39: #{_churn_forward_impl.1} parent=0 // pred_check_branch
    %921 = sbr.rel (0) target = $region41
  $region40: #{_churn_forward_impl.1} parent=0 // pred_region
    _
  $region41: #{_churn_forward_impl.1} parent=0 // pred_fallthru
    _
  // Predicated region
  $region42: #{_churn_forward_impl.1} parent=0 // pred_check
    _
  $region43: #{_churn_forward_impl.1} parent=0 // pred_check_branch
    %923 = sbr.rel (0) target = $region45
  $region44: #{_churn_forward_impl.1} parent=0 // pred_region
    _
  $region45: #{_churn_forward_impl.1} parent=0 // pred_fallthru
    _

</llo_original>
